<compile_context>
chip_gen: v5e
topology: v5e:2x2
jax: 0.10.0
libtpu: 0.0.40
codegen_flags: <defaults>
</compile_context>

<pallas_src>
import functools

import jax
import jax.numpy as jnp
from jax.experimental import pallas as pl
from jax.experimental.pallas import tpu as pltpu


def _round_up(x, m):
    return ((x + m - 1) // m) * m


def _compute_loss(x_ref, loss_type):
    """Per-box IOU / GIOU loss on a fused (8, TR, 128) coordinate slab (f32 out)."""
    pcx = x_ref[0].astype(jnp.float32)
    pcy = x_ref[1].astype(jnp.float32)
    pw = x_ref[2].astype(jnp.float32)
    ph = x_ref[3].astype(jnp.float32)
    tcx = x_ref[4].astype(jnp.float32)
    tcy = x_ref[5].astype(jnp.float32)
    tw = x_ref[6].astype(jnp.float32)
    th = x_ref[7].astype(jnp.float32)

    # half-extents / corners (reused by the giou branch)
    phw, phh = pw * 0.5, ph * 0.5
    thw, thh = tw * 0.5, th * 0.5
    p_l, p_r = pcx - phw, pcx + phw
    p_t, p_b = pcy - phh, pcy + phh
    t_l, t_r = tcx - thw, tcx + thw
    t_t, t_b = tcy - thh, tcy + thh

    # intersection (clamped extents == (tl < br) enable mask, fewer VPU ops)
    tl_x = jnp.maximum(p_l, t_l)
    tl_y = jnp.maximum(p_t, t_t)
    br_x = jnp.minimum(p_r, t_r)
    br_y = jnp.minimum(p_b, t_b)
    area_i = jnp.maximum(br_x - tl_x, 0.0) * jnp.maximum(br_y - tl_y, 0.0)

    area_p = pw * ph
    area_g = tw * th
    iou = area_i / (area_p + area_g - area_i + 1e-16)

    if loss_type == "iou":
        loss = 1.0 - iou * iou
    elif loss_type == "giou":
        c_w = jnp.maximum(p_r, t_r) - jnp.minimum(p_l, t_l)
        c_h = jnp.maximum(p_b, t_b) - jnp.minimum(p_t, t_t)
        area_c = c_w * c_h
        giou = iou - (area_c - area_i) / jnp.maximum(area_c, 1e-16)
        loss = 1.0 - jnp.clip(giou, -1.0, 1.0)
    else:
        raise ValueError(f"unknown loss_type {loss_type}")
    return loss


def _iou_loss_map_kernel(x_ref, o_ref, *, loss_type):
    # x_ref: (8, TR, 128) input dtype; o_ref: (TR, 128) f32
    o_ref[...] = _compute_loss(x_ref, loss_type)


def _iou_loss_reduce_kernel(x_ref, acc_ref, *, loss_type, tr, num_blocks, rows):
    # x_ref: (8, TR, 128); acc_ref: (1, 8, 128) per-core partial sums,
    # resident across the trailing ('arbitrary') grid axis.
    c = pl.program_id(0)
    s = pl.program_id(1)
    block_id = c * pl.num_programs(1) + s

    @pl.when(s == 0)
    def _():
        acc_ref[...] = jnp.zeros_like(acc_ref)

    # Skip duplicate blocks created by splitting cdiv(num_blocks, n_split).
    @pl.when(block_id < num_blocks)
    def _():
        loss = _compute_loss(x_ref, loss_type)  # (tr, 128) f32

        if rows % tr != 0:
            # Partial last block: the DMA leaves garbage in the tail rows of
            # the VMEM buffer.  (Wrapper padding itself uses 1.0-boxes and
            # contributes exactly 0, so only this garbage needs masking.)
            row = block_id * tr + jax.lax.broadcasted_iota(jnp.int32, (tr, 128), 0)
            loss = jnp.where(row < rows, loss, 0.0)

        # Keep a full-vreg (8,128) accumulator per core; the cross-lane
        # reduce to a scalar happens once in the wrapper, not per step.
        acc_ref[0] += jnp.sum(loss.reshape(tr // 8, 8, 128), axis=0)


@functools.partial(jax.jit, static_argnames=("reduction", "loss_type", "max_tile_rows"))
def iou_loss(pred, target, reduction="none", loss_type="iou", max_tile_rows=1024):
    """Pallas implementation of IOUloss.forward (boxes in cx,cy,w,h form)."""
    assert pred.shape[0] == target.shape[0]
    pred = pred.reshape(-1, 4)
    target = target.reshape(-1, 4)
    n = pred.shape[0]
    assert n < 2**31  # in-kernel row/lane indices are int32

    # Keep the input dtype through the DMA (bf16 stays bf16); compute in f32
    # inside the kernel.  Non-float inputs fall back to f32.
    dtype = jnp.promote_types(pred.dtype, target.dtype)
    if not jnp.issubdtype(dtype, jnp.floating):
        dtype = jnp.dtype(jnp.float32)
    pred = pred.astype(dtype)
    target = target.astype(dtype)

    lanes = 128
    sub = max(8, 32 // jnp.dtype(dtype).itemsize)  # 8 for f32, 16 for bf16
    r = pl.cdiv(n, lanes)                          # rows of 128 boxes
    rows = _round_up(r, sub)                       # sublane-aligned row count
    tr = min(_round_up(max_tile_rows, sub), rows)  # tile rows (<= rows)
    n_pad = rows * lanes
    num_blocks = pl.cdiv(rows, tr)                 # partial last block allowed

    # Single fused coordinate-major slab (one relayout pass inside this jit):
    # planes 0..3 = pred, 4..7 = target.  Pad with 1.0 -> padded boxes are
    # identical unit boxes -> loss exactly 0 (no mask needed for padding).
    boxes = jnp.concatenate([pred, target], axis=1)               # (n, 8)
    slab = jnp.pad(
        boxes.T, ((0, 0), (0, n_pad - n)), constant_values=1.0
    ).reshape(8, rows, lanes)

    cparams = dict(vmem_limit_bytes=32 * 1024 * 1024)

    if reduction in ("mean", "sum"):
        # Fused reduction, split across 2 accumulators so the leading
        # 'parallel' axis can be sharded over both TensorCores on megacore.
        n_split = 2 if num_blocks >= 2 else 1
        steps = pl.cdiv(num_blocks, n_split)

        def x_map(c, s):
            b = jnp.minimum(c * steps + s, num_blocks - 1)  # clamp OOB blocks
            return (0, b, 0)

        kernel = functools.partial(
            _iou_loss_reduce_kernel,
            loss_type=loss_type, tr=tr, num_blocks=num_blocks, rows=rows,
        )
        partials = pl.pallas_call(
            kernel,
            out_shape=jax.ShapeDtypeStruct((n_split, 8, lanes), jnp.float32),
            grid_spec=pltpu.PrefetchScalarGridSpec(
                num_scalar_prefetch=0,
                grid=(n_split, steps),
                in_specs=[pl.BlockSpec((8, tr, lanes), x_map)],
                out_specs=pl.BlockSpec((1, 8, lanes), lambda c, s: (c, 0, 0)),
            ),
            compiler_params=pltpu.CompilerParams(
                dimension_semantics=("parallel", "arbitrary"), **cparams
            ),
        )(slab)
        total = jnp.sum(partials)
        if reduction == "mean":
            return total / jnp.float32(n)
        return total

    # reduction == 'none' (any other string behaves like 'none', as in torch)
    kernel = functools.partial(_iou_loss_map_kernel, loss_type=loss_type)
    out = pl.pallas_call(
        kernel,
        out_shape=jax.ShapeDtypeStruct((rows, lanes), jnp.float32),
        grid_spec=pltpu.PrefetchScalarGridSpec(
            num_scalar_prefetch=0,
            grid=(num_blocks,),
            in_specs=[pl.BlockSpec((8, tr, lanes), lambda i: (0, i, 0))],
            out_specs=pl.BlockSpec((tr, lanes), lambda i: (i, 0)),
        ),
        compiler_params=pltpu.CompilerParams(
            dimension_semantics=("parallel",), **cparams
        ),
    )(slab)
    return out.reshape(-1)[:n]


def _iou_loss_ref(pred, target, reduction="none", loss_type="iou"):
    """Pure-JAX reference mirroring the PyTorch module."""
    pred = pred.reshape(-1, 4).astype(jnp.float32)
    target = target.reshape(-1, 4).astype(jnp.float32)
    tl = jnp.maximum(pred[:, :2] - pred[:, 2:] / 2, target[:, :2] - target[:, 2:] / 2)
    br = jnp.minimum(pred[:, :2] + pred[:, 2:] / 2, target[:, :2] + target[:, 2:] / 2)
    area_p = jnp.prod(pred[:, 2:], axis=1)
    area_g = jnp.prod(target[:, 2:], axis=1)
    en = jnp.prod((tl < br).astype(jnp.float32), axis=1)
    area_i = jnp.prod(br - tl, axis=1) * en
    iou = area_i / (area_p + area_g - area_i + 1e-16)
    if loss_type == "iou":
        loss = 1 - iou ** 2
    else:
        c_tl = jnp.minimum(pred[:, :2] - pred[:, 2:] / 2, target[:, :2] - target[:, 2:] / 2)
        c_br = jnp.maximum(pred[:, :2] + pred[:, 2:] / 2, target[:, :2] + target[:, 2:] / 2)
        area_c = jnp.prod(c_br - c_tl, axis=1)
        giou = iou - (area_c - area_i) / jnp.maximum(area_c, 1e-16)
        loss = 1 - jnp.clip(giou, -1.0, 1.0)
    if reduction == "mean":
        loss = loss.mean()
    elif reduction == "sum":
        loss = loss.sum()
    return loss


def _make_boxes(key, shape):
    k1, k2 = jax.random.split(key)
    return jnp.concatenate(
        [jax.random.uniform(k1, shape[:-1] + (2,)) * 10.0,        # centers
         jax.random.uniform(k2, shape[:-1] + (2,)) * 4.0 + 0.5],  # positive w,h
        axis=-1,
    )


if __name__ == "__main__":
    key = jax.random.PRNGKey(0)
    kp, kt, kp2, kt2 = jax.random.split(key, 4)

    ok = True

    # Case 1: tiny (2, 100, 4) boxes, single block.
    pred = _make_boxes(kp, (2, 100, 4))
    target = _make_boxes(kt, (2, 100, 4))
    # Case 2: (2, 1500, 4) boxes with a small forced tile so the multi-block,
    # partial-last-block and core-split reduce paths are exercised.
    pred2 = _make_boxes(kp2, (2, 1500, 4))
    target2 = _make_boxes(kt2, (2, 1500, 4))

    cases = [
        (pred, target, dict()),
        (pred2, target2, dict(max_tile_rows=16)),
    ]

    for p_in, t_in, extra in cases:
        nn = p_in.shape[0] * p_in.shape[1]
        for loss_type in ("iou", "giou"):
            # per-box loss path
            out = jax.block_until_ready(
                iou_loss(p_in, t_in, reduction="none", loss_type=loss_type, **extra))
            ref = jax.block_until_ready(_iou_loss_ref(p_in, t_in, "none", loss_type))
            if out.shape != (nn,) or not jnp.allclose(out, ref, atol=1e-5, rtol=1e-5):
                ok = False
            # fused in-kernel reductions
            for red in ("mean", "sum"):
                out = jax.block_until_ready(
                    iou_loss(p_in, t_in, reduction=red, loss_type=loss_type, **extra))
                ref = jax.block_until_ready(_iou_loss_ref(p_in, t_in, red, loss_type))
                if not jnp.allclose(out, ref, atol=1e-4, rtol=1e-5):
                    ok = False

    if ok:
        print("KERNEL_OK")
</pallas_src>

<mosaic_0001>
module attributes {stable_mosaic.version = 11 : i64} {
  func.func @_iou_loss_map_kernel(%arg0: i32, %arg1: memref<8x8x128xf32, #tpu.memory_space<vmem>>, %arg2: memref<8x128xf32, #tpu.memory_space<vmem>>) attributes {dimension_semantics = [#tpu.dimension_semantics<parallel>], iteration_bounds = array<i64: 1>, scalar_prefetch = 0 : i64, scratch_operands = 0 : i64, tpu.core_type = #tpu.core_type<tc>, window_params = [{transform_indices = @transform_0, window_bounds = array<i64: 8, 8, 128>}, {transform_indices = @transform_1, window_bounds = array<i64: 8, 128>}]} {
    %c0 = arith.constant 0 : index
    %c0_0 = arith.constant 0 : index
    %c0_1 = arith.constant 0 : index
    %0 = vector.load %arg1[%c0, %c0_0, %c0_1] : memref<8x8x128xf32, #tpu.memory_space<vmem>>, vector<1x8x128xf32>
    %1 = vector.shape_cast %0 : vector<1x8x128xf32> to vector<8x128xf32>
    %c1 = arith.constant 1 : index
    %c0_2 = arith.constant 0 : index
    %c0_3 = arith.constant 0 : index
    %2 = vector.load %arg1[%c1, %c0_2, %c0_3] : memref<8x8x128xf32, #tpu.memory_space<vmem>>, vector<1x8x128xf32>
    %3 = vector.shape_cast %2 : vector<1x8x128xf32> to vector<8x128xf32>
    %c2 = arith.constant 2 : index
    %c0_4 = arith.constant 0 : index
    %c0_5 = arith.constant 0 : index
    %4 = vector.load %arg1[%c2, %c0_4, %c0_5] : memref<8x8x128xf32, #tpu.memory_space<vmem>>, vector<1x8x128xf32>
    %5 = vector.shape_cast %4 : vector<1x8x128xf32> to vector<8x128xf32>
    %c3 = arith.constant 3 : index
    %c0_6 = arith.constant 0 : index
    %c0_7 = arith.constant 0 : index
    %6 = vector.load %arg1[%c3, %c0_6, %c0_7] : memref<8x8x128xf32, #tpu.memory_space<vmem>>, vector<1x8x128xf32>
    %7 = vector.shape_cast %6 : vector<1x8x128xf32> to vector<8x128xf32>
    %c4 = arith.constant 4 : index
    %c0_8 = arith.constant 0 : index
    %c0_9 = arith.constant 0 : index
    %8 = vector.load %arg1[%c4, %c0_8, %c0_9] : memref<8x8x128xf32, #tpu.memory_space<vmem>>, vector<1x8x128xf32>
    %9 = vector.shape_cast %8 : vector<1x8x128xf32> to vector<8x128xf32>
    %c5 = arith.constant 5 : index
    %c0_10 = arith.constant 0 : index
    %c0_11 = arith.constant 0 : index
    %10 = vector.load %arg1[%c5, %c0_10, %c0_11] : memref<8x8x128xf32, #tpu.memory_space<vmem>>, vector<1x8x128xf32>
    %11 = vector.shape_cast %10 : vector<1x8x128xf32> to vector<8x128xf32>
    %c6 = arith.constant 6 : index
    %c0_12 = arith.constant 0 : index
    %c0_13 = arith.constant 0 : index
    %12 = vector.load %arg1[%c6, %c0_12, %c0_13] : memref<8x8x128xf32, #tpu.memory_space<vmem>>, vector<1x8x128xf32>
    %13 = vector.shape_cast %12 : vector<1x8x128xf32> to vector<8x128xf32>
    %c7 = arith.constant 7 : index
    %c0_14 = arith.constant 0 : index
    %c0_15 = arith.constant 0 : index
    %14 = vector.load %arg1[%c7, %c0_14, %c0_15] : memref<8x8x128xf32, #tpu.memory_space<vmem>>, vector<1x8x128xf32>
    %15 = vector.shape_cast %14 : vector<1x8x128xf32> to vector<8x128xf32>
    %cst = arith.constant 5.000000e-01 : f32
    %16 = vector.broadcast %cst : f32 to vector<8x128xf32>
    %17 = arith.mulf %5, %16 : vector<8x128xf32>
    %cst_16 = arith.constant 5.000000e-01 : f32
    %18 = vector.broadcast %cst_16 : f32 to vector<8x128xf32>
    %19 = arith.mulf %7, %18 : vector<8x128xf32>
    %cst_17 = arith.constant 5.000000e-01 : f32
    %20 = vector.broadcast %cst_17 : f32 to vector<8x128xf32>
    %21 = arith.mulf %13, %20 : vector<8x128xf32>
    %cst_18 = arith.constant 5.000000e-01 : f32
    %22 = vector.broadcast %cst_18 : f32 to vector<8x128xf32>
    %23 = arith.mulf %15, %22 : vector<8x128xf32>
    %24 = arith.subf %1, %17 : vector<8x128xf32>
    %25 = arith.addf %1, %17 : vector<8x128xf32>
    %26 = arith.subf %3, %19 : vector<8x128xf32>
    %27 = arith.addf %3, %19 : vector<8x128xf32>
    %28 = arith.subf %9, %21 : vector<8x128xf32>
    %29 = arith.addf %9, %21 : vector<8x128xf32>
    %30 = arith.subf %11, %23 : vector<8x128xf32>
    %31 = arith.addf %11, %23 : vector<8x128xf32>
    %32 = arith.maximumf %24, %28 : vector<8x128xf32>
    %33 = arith.maximumf %26, %30 : vector<8x128xf32>
    %34 = arith.minimumf %25, %29 : vector<8x128xf32>
    %35 = arith.minimumf %27, %31 : vector<8x128xf32>
    %36 = arith.subf %34, %32 : vector<8x128xf32>
    %cst_19 = arith.constant 0.000000e+00 : f32
    %37 = vector.broadcast %cst_19 : f32 to vector<8x128xf32>
    %38 = arith.maximumf %36, %37 : vector<8x128xf32>
    %39 = arith.subf %35, %33 : vector<8x128xf32>
    %cst_20 = arith.constant 0.000000e+00 : f32
    %40 = vector.broadcast %cst_20 : f32 to vector<8x128xf32>
    %41 = arith.maximumf %39, %40 : vector<8x128xf32>
    %42 = arith.mulf %38, %41 : vector<8x128xf32>
    %43 = arith.mulf %5, %7 : vector<8x128xf32>
    %44 = arith.mulf %13, %15 : vector<8x128xf32>
    %45 = arith.addf %43, %44 : vector<8x128xf32>
    %46 = arith.subf %45, %42 : vector<8x128xf32>
    %cst_21 = arith.constant 1.000000e-16 : f32
    %47 = vector.broadcast %cst_21 : f32 to vector<8x128xf32>
    %48 = arith.addf %46, %47 : vector<8x128xf32>
    %49 = arith.divf %42, %48 : vector<8x128xf32>
    %50 = arith.mulf %49, %49 : vector<8x128xf32>
    %cst_22 = arith.constant 1.000000e+00 : f32
    %51 = vector.broadcast %cst_22 : f32 to vector<8x128xf32>
    %52 = arith.subf %51, %50 : vector<8x128xf32>
    %c0_23 = arith.constant 0 : index
    %c0_24 = arith.constant 0 : index
    %53 = vector.load %arg2[%c0_23, %c0_24] : memref<8x128xf32, #tpu.memory_space<vmem>>, vector<8x128xf32>
    tpu.vector_store %arg2[%c0_23, %c0_24], %52 {strides = array<i32>} : memref<8x128xf32, #tpu.memory_space<vmem>>, vector<8x128xf32>,
    return
  }
  func.func @transform_0(%arg0: i32) -> (i32, i32, i32) {
    %c0_i32 = arith.constant 0 : i32
    %c0_i32_0 = arith.constant 0 : i32
    %c0_i32_1 = arith.constant 0 : i32
    return %c0_i32, %arg0, %c0_i32_0 : i32, i32, i32
  }
  func.func @transform_1(%arg0: i32) -> (i32, i32) {
    %c0_i32 = arith.constant 0 : i32
    %c0_i32_0 = arith.constant 0 : i32
    return %arg0, %c0_i32 : i32, i32
  }
}

</mosaic_0001>

<llo_original>
// kernel: iou_loss.1
$region0: #{iou_loss.1}
  #allocation0 [shape = 'u32[]', space=smem, size = 0x4, offset = 0x4, fixed_abs, tag = 'smem constant byte address 0x4 - core index']
  #allocation1 [shape = 'u32[72,128]{1,0:T(1,128)}', space=vmem, size = 0x9000, scoped, tag = 'internal scratch']
  %s0 = inlined_call_operand.vmem [shape: f32[8,8,128], index: 0, kind: input, shape index: {}]
  %s1 = inlined_call_operand.vmem [shape: f32[8,128], index: 1, kind: output, shape index: {}]
  %s2 = sld [smem:[#allocation0]]
  $region14: #{iou_loss.1} parent=0
    _
  %s4 = ssub.s32 1, %s2
  %s5 = scalar_select 0, %s4, %s2
  // Predicated region
  $region2: #{iou_loss.1} parent=0 // pred_check
    _
  $region3: #{iou_loss.1} parent=0 // pred_check_branch
    %7 = sbr.rel (0) target = $region5
  $region4: #{iou_loss.1} parent=0 // pred_region
    _
  $region5: #{iou_loss.1} parent=0 // pred_fallthru
    _
  %v8 = vld [vmem:[%s0] sm:$0xff]
  %s9 = scalar_lea.vmem %s0, 8
  %v10 = vld [vmem:[%s9] sm:$0xff]
  %s11 = scalar_lea.vmem %s0, 16
  %v12 = vld [vmem:[%s11] sm:$0xff]
  %s13 = scalar_lea.vmem %s0, 24
  %v14 = vld [vmem:[%s13] sm:$0xff]
  %s15 = scalar_lea.vmem %s0, 32
  %v16 = vld [vmem:[%s15] sm:$0xff]
  %s17 = scalar_lea.vmem %s0, 40
  %v18 = vld [vmem:[%s17] sm:$0xff]
  %s19 = scalar_lea.vmem %s0, 48
  %v20 = vld [vmem:[%s19] sm:$0xff]
  %s21 = scalar_lea.vmem %s0, 56
  %v22 = vld [vmem:[%s21] sm:$0xff]
  %v23 = vmul.f32 %v12, 0.5
  %v24 = vmul.f32 %v14, 0.5
  %v25 = vmul.f32 %v20, 0.5
  %v26 = vmul.f32 %v22, 0.5
  %v27 = vsub.f32 %v8, %v23
  %v28 = vadd.f32 %v8, %v23
  %v29 = vsub.f32 %v10, %v24
  %v30 = vadd.f32 %v10, %v24
  %v31 = vsub.f32 %v16, %v25
  %v32 = vadd.f32 %v16, %v25
  %v33 = vsub.f32 %v18, %v26
  %v34 = vadd.f32 %v18, %v26
  %v35 = vmax.f32 %v27, %v31
  %v36 = vmax.f32 %v29, %v33
  %v37 = vmin.f32 %v28, %v32
  %v38 = vmin.f32 %v30, %v34
  %v39 = vsub.f32 %v37, %v35
  %v40 = vmax.f32 %v39, 0.0
  %v41 = vsub.f32 %v38, %v36
  %v42 = vmax.f32 %v41, 0.0
  %v43 = vmul.f32 %v40, %v42
  %v44 = vmul.f32 %v12, %v14
  %v45 = vmul.f32 %v20, %v22
  %v46 = vadd.f32 %v44, %v45
  %v47 = vsub.f32 %v46, %v43
  %v48 = vadd.f32 %v47, 1e-16
  %v49 = vrcp.pop %v48
  %v50 = vmul.f32 %v48, %v49
  %v51 = vsub.f32 1.0, %v50
  %v52 = vmul.f32 %v49, %v51
  %v53 = vadd.f32 %v49, %v52
  %vm54 = vweird.f32 %v48
  %vm55 = vweird.f32 %v49
  %vm56 = vmor %vm54, %vm55
  %v57 = vsel %vm56, %v49, %v53
  %v58 = vand.u32 2147483647, %v48
  %vm59 = vcmp.eq.f32.partialorder %v58, 8.507059e+37
  %v60 = vand.u32 %v48, 2147483648
  %v61 = vor.u32 1.1754944e-38, %v60
  %v62 = vsel %vm59, %v61, %v57
  %v63 = vmul.f32 %v43, %v62
  %v64 = vmul.f32 %v63, %v63
  %v65 = vsub.f32 1.0, %v64
  %66 = vst [vmem:[%s1] sm:$0xff] %v65
  // Predicated region
  $region6: #{iou_loss.1} parent=0 // pred_check
    _
  $region7: #{iou_loss.1} parent=0 // pred_check_branch
    %68 = sbr.rel (0) target = $region9
  $region8: #{iou_loss.1} parent=0 // pred_region
    _
  $region9: #{iou_loss.1} parent=0 // pred_fallthru
    _
  // Predicated region
  $region10: #{iou_loss.1} parent=0 // pred_check
    _
  $region11: #{iou_loss.1} parent=0 // pred_check_branch
    %70 = sbr.rel (0) target = $region13
  $region12: #{iou_loss.1} parent=0 // pred_region
    _
  $region13: #{iou_loss.1} parent=0 // pred_fallthru
    _

</llo_original>
